<compile_context>
chip_gen: v5e
topology: v5e:2x2
jax: 0.10.0
libtpu: 0.0.40
codegen_flags: <defaults>
</compile_context>

<pallas_src>
import functools
import math

import jax
import jax.numpy as jnp
from jax.experimental import pallas as pl
from jax.experimental.pallas import tpu as pltpu


def mha_kernel(q_ref, k_ref, v_ref, mask_ref,
               wq_ref, wk_ref, wv_ref,
               bq_ref, bk_ref, bv_ref,
               wo_ref, bo_ref,
               o_ref,
               acc_ref,
               *, scale, compute_dtype):
    # q_ref: (1, L, E)  k_ref/v_ref: (1, S, E)  mask_ref: (L, S)
    # wq/wk/wv_ref: (1, E, d)   bq/bk/bv_ref: (1, 1, d)
    # wo_ref: (1, d, E)         bo_ref: (1, E)
    # o_ref: (1, L, E)          acc_ref: (L, E) f32 scratch
    hh = pl.program_id(1)

    @pl.when(hh == 0)
    def _init():
        acc_ref[...] = jnp.zeros_like(acc_ref)

    xq = q_ref[0].astype(compute_dtype)          # (L, E)
    xk = k_ref[0].astype(compute_dtype)          # (S, E)
    xv = v_ref[0].astype(compute_dtype)          # (S, E)

    # Per-head projections: bf16 MXU inputs, f32 accumulation, f32 bias add.
    q = jnp.dot(xq, wq_ref[0].astype(compute_dtype),
                preferred_element_type=jnp.float32) + bq_ref[0]      # (L, d)
    k = jnp.dot(xk, wk_ref[0].astype(compute_dtype),
                preferred_element_type=jnp.float32) + bk_ref[0]      # (S, d)
    v = jnp.dot(xv, wv_ref[0].astype(compute_dtype),
                preferred_element_type=jnp.float32) + bv_ref[0]      # (S, d)

    # Scaled scores (contract over head_dim, no in-kernel transpose) + mask.
    s = jax.lax.dot_general((q * scale).astype(compute_dtype),
                            k.astype(compute_dtype),
                            dimension_numbers=(((1,), (1,)), ((), ())),
                            preferred_element_type=jnp.float32)      # (L, S)
    s = s + mask_ref[...]

    # Softmax in f32.
    m = jnp.max(s, axis=-1, keepdims=True)
    p = jnp.exp(s - m)
    p = p * pl.reciprocal(jnp.sum(p, axis=-1, keepdims=True), approx=False)

    # Attention dropout: identity at inference.
    # TODO(synk): pltpu.prng_random_bits mask if train-mode dropout is needed.

    attn = jnp.dot(p.astype(compute_dtype), v.astype(compute_dtype),
                   preferred_element_type=jnp.float32)               # (L, d)

    # Partial output projection for this head, accumulated across heads.
    acc_ref[...] += jnp.dot(attn.astype(compute_dtype),
                            wo_ref[0].astype(compute_dtype),
                            preferred_element_type=jnp.float32)      # (L, E)

    @pl.when(hh == pl.num_programs(1) - 1)
    def _finalize():
        o_ref[0] = (acc_ref[...] + bo_ref[...]).astype(o_ref.dtype)


def multi_head_attention(query, key, value, mask,
                         in_proj_w, in_proj_b, out_proj_w, out_proj_b,
                         num_heads, *, compute_dtype=jnp.bfloat16):
    """query: (L, N, E); key/value: (S, N, E); mask: (L, S) float-additive
    or bool (True = masked).  Weights follow torch.nn.MultiheadAttention:
    in_proj_w (3E, E), in_proj_b (3E,), out_proj_w (E, E), out_proj_b (E,).
    Returns (L, N, E)."""
    L, N, E = query.shape
    S = key.shape[0]
    assert E % num_heads == 0, "dim_hidden must be divisible by num_heads"
    d = E // num_heads
    scale = 1.0 / math.sqrt(d)

    # Batch-major layout: lane axis = E (lane-dense stores).
    q_b = jnp.transpose(query, (1, 0, 2))     # (N, L, E)
    k_b = jnp.transpose(key, (1, 0, 2))       # (N, S, E)
    v_b = jnp.transpose(value, (1, 0, 2))     # (N, S, E)

    if jnp.issubdtype(mask.dtype, jnp.bool_):
        mask_f = jnp.where(mask, jnp.float32(-1e9), jnp.float32(0.0))
    else:
        mask_f = mask.astype(jnp.float32)
    # TODO(synk): support 3-D (N*h, L, S) attn_mask if ever required.

    # Per-head weight layouts so the kernel computes plain x @ W.
    wq_t = in_proj_w[0:E].T.reshape(E, num_heads, d).transpose(1, 0, 2)        # (h, E, d)
    wk_t = in_proj_w[E:2 * E].T.reshape(E, num_heads, d).transpose(1, 0, 2)    # (h, E, d)
    wv_t = in_proj_w[2 * E:3 * E].T.reshape(E, num_heads, d).transpose(1, 0, 2)
    bq = in_proj_b[0:E].reshape(num_heads, 1, d)
    bk = in_proj_b[E:2 * E].reshape(num_heads, 1, d)
    bv = in_proj_b[2 * E:3 * E].reshape(num_heads, 1, d)
    wo_h = out_proj_w.T.reshape(num_heads, d, E)                                # (h, d, E)
    bo = out_proj_b.reshape(1, E)

    kernel = functools.partial(mha_kernel, scale=scale,
                               compute_dtype=compute_dtype)

    flops = 4 * N * num_heads * d * (L * E + S * E + L * S)
    transcendentals = N * num_heads * L * S
    bytes_accessed = 4 * (2 * N * L * E + 2 * N * S * E + L * S
                          + 4 * E * E + 4 * E)

    out_b = pl.pallas_call(
        kernel,
        out_shape=jax.ShapeDtypeStruct((N, L, E), query.dtype),
        grid_spec=pltpu.PrefetchScalarGridSpec(
            num_scalar_prefetch=0,
            grid=(N, num_heads),
            in_specs=[
                pl.BlockSpec((1, L, E), lambda b, hh: (b, 0, 0)),   # query
                pl.BlockSpec((1, S, E), lambda b, hh: (b, 0, 0)),   # key
                pl.BlockSpec((1, S, E), lambda b, hh: (b, 0, 0)),   # value
                pl.BlockSpec((L, S), lambda b, hh: (0, 0)),         # mask
                pl.BlockSpec((1, E, d), lambda b, hh: (hh, 0, 0)),  # Wq^T head
                pl.BlockSpec((1, E, d), lambda b, hh: (hh, 0, 0)),  # Wk^T head
                pl.BlockSpec((1, E, d), lambda b, hh: (hh, 0, 0)),  # Wv^T head
                pl.BlockSpec((1, 1, d), lambda b, hh: (hh, 0, 0)),  # bq head
                pl.BlockSpec((1, 1, d), lambda b, hh: (hh, 0, 0)),  # bk head
                pl.BlockSpec((1, 1, d), lambda b, hh: (hh, 0, 0)),  # bv head
                pl.BlockSpec((1, d, E), lambda b, hh: (hh, 0, 0)),  # Wo^T slice
                pl.BlockSpec((1, E), lambda b, hh: (0, 0)),         # bo
            ],
            out_specs=pl.BlockSpec((1, L, E), lambda b, hh: (b, 0, 0)),
            scratch_shapes=[pltpu.VMEM((L, E), jnp.float32)],
        ),
        compiler_params=pltpu.CompilerParams(
            dimension_semantics=("parallel", "arbitrary")),
        cost_estimate=pl.CostEstimate(flops=flops,
                                      transcendentals=transcendentals,
                                      bytes_accessed=bytes_accessed),
    )(q_b, k_b, v_b, mask_f, wq_t, wk_t, wv_t, bq, bk, bv, wo_h, bo)

    return jnp.transpose(out_b, (1, 0, 2))   # back to (L, N, E)


def reference_mha(query, key, value, mask, in_proj_w, in_proj_b,
                  out_proj_w, out_proj_b, num_heads):
    """Pure-JAX replica of torch.nn.MultiheadAttention forward (eval mode)."""
    L, N, E = query.shape
    S = key.shape[0]
    d = E // num_heads
    with jax.default_matmul_precision("highest"):
        wq, wk, wv = in_proj_w[:E], in_proj_w[E:2 * E], in_proj_w[2 * E:]
        bq, bk, bv = in_proj_b[:E], in_proj_b[E:2 * E], in_proj_b[2 * E:]
        q = jnp.einsum("lne,fe->lnf", query, wq) + bq
        k = jnp.einsum("sne,fe->snf", key, wk) + bk
        v = jnp.einsum("sne,fe->snf", value, wv) + bv
        q = q.reshape(L, N, num_heads, d).transpose(1, 2, 0, 3)
        k = k.reshape(S, N, num_heads, d).transpose(1, 2, 0, 3)
        v = v.reshape(S, N, num_heads, d).transpose(1, 2, 0, 3)
        s = jnp.einsum("nhld,nhsd->nhls", q / math.sqrt(d), k)
        if jnp.issubdtype(mask.dtype, jnp.bool_):
            s = s + jnp.where(mask, -1e9, 0.0)
        else:
            s = s + mask
        p = jax.nn.softmax(s, axis=-1)
        o = jnp.einsum("nhls,nhsd->nhld", p, v)
        o = o.transpose(2, 0, 1, 3).reshape(L, N, E)
        out = jnp.einsum("lne,fe->lnf", o, out_proj_w) + out_proj_b
    return out


if __name__ == "__main__":
    L, S, N, E, n_heads = 16, 16, 2, 128, 4   # seq, seq_kv, batch, dim_hidden, h

    rng = jax.random.PRNGKey(0)
    kq, kk, kv, kw, kb, kow, kob = jax.random.split(rng, 7)

    query = jax.random.normal(kq, (L, N, E), jnp.float32)
    key_in = jax.random.normal(kk, (S, N, E), jnp.float32)
    value = jax.random.normal(kv, (S, N, E), jnp.float32)

    lim = 1.0 / math.sqrt(E)
    in_proj_w = jax.random.uniform(kw, (3 * E, E), jnp.float32, -lim, lim)
    in_proj_b = jax.random.uniform(kb, (3 * E,), jnp.float32, -lim, lim)
    out_proj_w = jax.random.uniform(kow, (E, E), jnp.float32, -lim, lim)
    out_proj_b = jax.random.uniform(kob, (E,), jnp.float32, -lim, lim)

    # Causal additive float mask (0 = attend, -1e9 = masked).
    causal = jnp.tril(jnp.ones((L, S), jnp.bool_))
    mask = jnp.where(causal, 0.0, -1e9).astype(jnp.float32)

    ref = reference_mha(query, key_in, value, mask, in_proj_w, in_proj_b,
                        out_proj_w, out_proj_b, n_heads)

    # f32 path: tight semantic check.
    out_f32 = multi_head_attention(query, key_in, value, mask,
                                   in_proj_w, in_proj_b,
                                   out_proj_w, out_proj_b, n_heads,
                                   compute_dtype=jnp.float32)
    jax.block_until_ready(out_f32)
    assert out_f32.shape == (L, N, E)
    assert jnp.allclose(out_f32, ref, atol=1e-4, rtol=1e-4)

    # bf16 MXU path (performance default): looser tolerance.
    out_bf16 = multi_head_attention(query, key_in, value, mask,
                                    in_proj_w, in_proj_b,
                                    out_proj_w, out_proj_b, n_heads,
                                    compute_dtype=jnp.bfloat16)
    jax.block_until_ready(out_bf16)
    assert jnp.allclose(out_bf16, ref, atol=5e-2, rtol=5e-2)

    print("KERNEL_OK")
</pallas_src>

<mosaic_0001>
module attributes {stable_mosaic.version = 11 : i64} {
  func.func @mha_kernel(%arg0: i32, %arg1: i32, %arg2: memref<1x16x128xf32, #tpu.memory_space<vmem>>, %arg3: memref<1x16x128xf32, #tpu.memory_space<vmem>>, %arg4: memref<1x16x128xf32, #tpu.memory_space<vmem>>, %arg5: memref<16x16xf32, #tpu.memory_space<vmem>>, %arg6: memref<1x128x32xf32, #tpu.memory_space<vmem>>, %arg7: memref<1x128x32xf32, #tpu.memory_space<vmem>>, %arg8: memref<1x128x32xf32, #tpu.memory_space<vmem>>, %arg9: memref<1x1x32xf32, #tpu.memory_space<vmem>>, %arg10: memref<1x1x32xf32, #tpu.memory_space<vmem>>, %arg11: memref<1x1x32xf32, #tpu.memory_space<vmem>>, %arg12: memref<1x32x128xf32, #tpu.memory_space<vmem>>, %arg13: memref<1x128xf32, #tpu.memory_space<vmem>>, %arg14: memref<1x16x128xf32, #tpu.memory_space<vmem>>, %arg15: memref<16x128xf32, #tpu.memory_space<vmem>>) attributes {dimension_semantics = [#tpu.dimension_semantics<parallel>, #tpu.dimension_semantics<arbitrary>], iteration_bounds = array<i64: 2, 4>, scalar_prefetch = 0 : i64, scratch_operands = 1 : i64, tpu.core_type = #tpu.core_type<tc>, window_params = [{transform_indices = @transform_0, window_bounds = array<i64: 1, 16, 128>}, {transform_indices = @transform_1, window_bounds = array<i64: 1, 16, 128>}, {transform_indices = @transform_2, window_bounds = array<i64: 1, 16, 128>}, {pipeline_mode = #tpu.pipeline_mode<synchronous>, transform_indices = @transform_3, window_bounds = array<i64: 16, 16>}, {transform_indices = @transform_4, window_bounds = array<i64: 1, 128, 32>}, {transform_indices = @transform_5, window_bounds = array<i64: 1, 128, 32>}, {transform_indices = @transform_6, window_bounds = array<i64: 1, 128, 32>}, {transform_indices = @transform_7, window_bounds = array<i64: 1, 1, 32>}, {transform_indices = @transform_8, window_bounds = array<i64: 1, 1, 32>}, {transform_indices = @transform_9, window_bounds = array<i64: 1, 1, 32>}, {transform_indices = @transform_10, window_bounds = array<i64: 1, 32, 128>}, {pipeline_mode = #tpu.pipeline_mode<synchronous>, transform_indices = @transform_11, window_bounds = array<i64: 1, 128>}, {transform_indices = @transform_12, window_bounds = array<i64: 1, 16, 128>}]} {
    %c0_i32 = arith.constant 0 : i32
    %0 = arith.cmpi eq, %arg1, %c0_i32 : i32
    %1 = arith.extui %0 : i1 to i32
    %c0_i32_0 = arith.constant 0 : i32
    %2 = arith.cmpi ne, %1, %c0_i32_0 : i32
    scf.if %2 {
      %cst_45 = arith.constant 0.000000e+00 : f32
      %55 = vector.broadcast %cst_45 : f32 to vector<16x128xf32>
      %c0_46 = arith.constant 0 : index
      %c0_47 = arith.constant 0 : index
      %56 = vector.load %arg15[%c0_46, %c0_47] : memref<16x128xf32, #tpu.memory_space<vmem>>, vector<16x128xf32>
      tpu.vector_store %arg15[%c0_46, %c0_47], %55 {strides = array<i32>} : memref<16x128xf32, #tpu.memory_space<vmem>>, vector<16x128xf32>,
    } else {
    }
    %c0 = arith.constant 0 : index
    %c0_1 = arith.constant 0 : index
    %c0_2 = arith.constant 0 : index
    %3 = vector.load %arg2[%c0, %c0_1, %c0_2] : memref<1x16x128xf32, #tpu.memory_space<vmem>>, vector<1x16x128xf32>
    %4 = vector.shape_cast %3 : vector<1x16x128xf32> to vector<16x128xf32>
    %c0_3 = arith.constant 0 : index
    %c0_4 = arith.constant 0 : index
    %c0_5 = arith.constant 0 : index
    %5 = vector.load %arg3[%c0_3, %c0_4, %c0_5] : memref<1x16x128xf32, #tpu.memory_space<vmem>>, vector<1x16x128xf32>
    %6 = vector.shape_cast %5 : vector<1x16x128xf32> to vector<16x128xf32>
    %c0_6 = arith.constant 0 : index
    %c0_7 = arith.constant 0 : index
    %c0_8 = arith.constant 0 : index
    %7 = vector.load %arg4[%c0_6, %c0_7, %c0_8] : memref<1x16x128xf32, #tpu.memory_space<vmem>>, vector<1x16x128xf32>
    %8 = vector.shape_cast %7 : vector<1x16x128xf32> to vector<16x128xf32>
    %c0_9 = arith.constant 0 : index
    %c0_10 = arith.constant 0 : index
    %c0_11 = arith.constant 0 : index
    %9 = vector.load %arg6[%c0_9, %c0_10, %c0_11] : memref<1x128x32xf32, #tpu.memory_space<vmem>>, vector<1x128x32xf32>
    %10 = vector.shape_cast %9 : vector<1x128x32xf32> to vector<128x32xf32>
    %cst = arith.constant dense<0.000000e+00> : vector<16x32xf32>
    %11 = tpu.matmul %4, %10, %cst {dimension_numbers = #tpu.dot_dimension_numbers<[1], [0], [0], [1], [0, 0, 1, 1], [], []>} : vector<16x128xf32>, vector<128x32xf32>, vector<16x32xf32> -> vector<16x32xf32>
    %c0_12 = arith.constant 0 : index
    %c0_13 = arith.constant 0 : index
    %c0_14 = arith.constant 0 : index
    %12 = vector.load %arg9[%c0_12, %c0_13, %c0_14] : memref<1x1x32xf32, #tpu.memory_space<vmem>>, vector<1x1x32xf32>
    %13 = vector.shape_cast %12 : vector<1x1x32xf32> to vector<1x32xf32>
    %14 = vector.broadcast %13 : vector<1x32xf32> to vector<16x32xf32>
    %15 = arith.addf %11, %14 : vector<16x32xf32>
    %c0_15 = arith.constant 0 : index
    %c0_16 = arith.constant 0 : index
    %c0_17 = arith.constant 0 : index
    %16 = vector.load %arg7[%c0_15, %c0_16, %c0_17] : memref<1x128x32xf32, #tpu.memory_space<vmem>>, vector<1x128x32xf32>
    %17 = vector.shape_cast %16 : vector<1x128x32xf32> to vector<128x32xf32>
    %cst_18 = arith.constant dense<0.000000e+00> : vector<16x32xf32>
    %18 = tpu.matmul %6, %17, %cst_18 {dimension_numbers = #tpu.dot_dimension_numbers<[1], [0], [0], [1], [0, 0, 1, 1], [], []>} : vector<16x128xf32>, vector<128x32xf32>, vector<16x32xf32> -> vector<16x32xf32>
    %c0_19 = arith.constant 0 : index
    %c0_20 = arith.constant 0 : index
    %c0_21 = arith.constant 0 : index
    %19 = vector.load %arg10[%c0_19, %c0_20, %c0_21] : memref<1x1x32xf32, #tpu.memory_space<vmem>>, vector<1x1x32xf32>
    %20 = vector.shape_cast %19 : vector<1x1x32xf32> to vector<1x32xf32>
    %21 = vector.broadcast %20 : vector<1x32xf32> to vector<16x32xf32>
    %22 = arith.addf %18, %21 : vector<16x32xf32>
    %c0_22 = arith.constant 0 : index
    %c0_23 = arith.constant 0 : index
    %c0_24 = arith.constant 0 : index
    %23 = vector.load %arg8[%c0_22, %c0_23, %c0_24] : memref<1x128x32xf32, #tpu.memory_space<vmem>>, vector<1x128x32xf32>
    %24 = vector.shape_cast %23 : vector<1x128x32xf32> to vector<128x32xf32>
    %cst_25 = arith.constant dense<0.000000e+00> : vector<16x32xf32>
    %25 = tpu.matmul %8, %24, %cst_25 {dimension_numbers = #tpu.dot_dimension_numbers<[1], [0], [0], [1], [0, 0, 1, 1], [], []>} : vector<16x128xf32>, vector<128x32xf32>, vector<16x32xf32> -> vector<16x32xf32>
    %c0_26 = arith.constant 0 : index
    %c0_27 = arith.constant 0 : index
    %c0_28 = arith.constant 0 : index
    %26 = vector.load %arg11[%c0_26, %c0_27, %c0_28] : memref<1x1x32xf32, #tpu.memory_space<vmem>>, vector<1x1x32xf32>
    %27 = vector.shape_cast %26 : vector<1x1x32xf32> to vector<1x32xf32>
    %28 = vector.broadcast %27 : vector<1x32xf32> to vector<16x32xf32>
    %29 = arith.addf %25, %28 : vector<16x32xf32>
    %cst_29 = arith.constant 0.176776692 : f32
    %30 = vector.broadcast %cst_29 : f32 to vector<16x32xf32>
    %31 = arith.mulf %15, %30 : vector<16x32xf32>
    %cst_30 = arith.constant dense<0.000000e+00> : vector<16x16xf32>
    %32 = tpu.matmul %31, %22, %cst_30 {dimension_numbers = #tpu.dot_dimension_numbers<[1], [1], [0], [0], [0, 0, 1, 0], [], []>} : vector<16x32xf32>, vector<16x32xf32>, vector<16x16xf32> -> vector<16x16xf32>
    %c0_31 = arith.constant 0 : index
    %c0_32 = arith.constant 0 : index
    %33 = vector.load %arg5[%c0_31, %c0_32] : memref<16x16xf32, #tpu.memory_space<vmem>>, vector<16x16xf32>
    %34 = arith.addf %32, %33 : vector<16x16xf32>
    %cst_33 = arith.constant dense<0xFF800000> : vector<16xf32>
    %35 = vector.multi_reduction <maximumf>, %34, %cst_33 [1] : vector<16x16xf32> to vector<16xf32>
    %36 = vector.shape_cast %35 : vector<16xf32> to vector<16x1xf32>
    %37 = vector.broadcast %36 : vector<16x1xf32> to vector<16x16xf32>
    %38 = arith.subf %34, %37 : vector<16x16xf32>
    %39 = math.exp %38 : vector<16x16xf32>
    %cst_34 = arith.constant dense<0.000000e+00> : vector<16xf32>
    %40 = vector.multi_reduction <add>, %39, %cst_34 [1] : vector<16x16xf32> to vector<16xf32>
    %41 = vector.shape_cast %40 : vector<16xf32> to vector<16x1xf32>
    %42 = tpu.reciprocal %41 : vector<16x1xf32> -> vector<16x1xf32>
    %43 = vector.broadcast %42 : vector<16x1xf32> to vector<16x16xf32>
    %44 = arith.mulf %39, %43 : vector<16x16xf32>
    %cst_35 = arith.constant dense<0.000000e+00> : vector<16x32xf32>
    %45 = tpu.matmul %44, %29, %cst_35 {dimension_numbers = #tpu.dot_dimension_numbers<[1], [0], [0], [1], [0, 0, 1, 1], [], []>} : vector<16x16xf32>, vector<16x32xf32>, vector<16x32xf32> -> vector<16x32xf32>
    %c0_36 = arith.constant 0 : index
    %c0_37 = arith.constant 0 : index
    %46 = vector.load %arg15[%c0_36, %c0_37] : memref<16x128xf32, #tpu.memory_space<vmem>>, vector<16x128xf32>
    %c0_38 = arith.constant 0 : index
    %c0_39 = arith.constant 0 : index
    %c0_40 = arith.constant 0 : index
    %47 = vector.load %arg12[%c0_38, %c0_39, %c0_40] : memref<1x32x128xf32, #tpu.memory_space<vmem>>, vector<1x32x128xf32>
    %48 = vector.shape_cast %47 : vector<1x32x128xf32> to vector<32x128xf32>
    %cst_41 = arith.constant dense<0.000000e+00> : vector<16x128xf32>
    %49 = tpu.matmul %45, %48, %cst_41 {dimension_numbers = #tpu.dot_dimension_numbers<[1], [0], [0], [1], [0, 0, 1, 1], [], []>} : vector<16x32xf32>, vector<32x128xf32>, vector<16x128xf32> -> vector<16x128xf32>
    %50 = arith.addf %46, %49 : vector<16x128xf32>
    %c0_42 = arith.constant 0 : index
    %c0_43 = arith.constant 0 : index
    %51 = vector.load %arg15[%c0_42, %c0_43] : memref<16x128xf32, #tpu.memory_space<vmem>>, vector<16x128xf32>
    tpu.vector_store %arg15[%c0_42, %c0_43], %50 {strides = array<i32>} : memref<16x128xf32, #tpu.memory_space<vmem>>, vector<16x128xf32>,
    %c3_i32 = arith.constant 3 : i32
    %52 = arith.cmpi eq, %arg1, %c3_i32 : i32
    %53 = arith.extui %52 : i1 to i32
    %c0_i32_44 = arith.constant 0 : i32
    %54 = arith.cmpi ne, %53, %c0_i32_44 : i32
    scf.if %54 {
      %c0_45 = arith.constant 0 : index
      %c0_46 = arith.constant 0 : index
      %55 = vector.load %arg15[%c0_45, %c0_46] : memref<16x128xf32, #tpu.memory_space<vmem>>, vector<16x128xf32>
      %c0_47 = arith.constant 0 : index
      %c0_48 = arith.constant 0 : index
      %56 = vector.load %arg13[%c0_47, %c0_48] : memref<1x128xf32, #tpu.memory_space<vmem>>, vector<1x128xf32>
      %57 = vector.broadcast %56 : vector<1x128xf32> to vector<16x128xf32>
      %58 = arith.addf %55, %57 : vector<16x128xf32>
      %c0_49 = arith.constant 0 : index
      %c0_50 = arith.constant 0 : index
      %c0_51 = arith.constant 0 : index
      %59 = vector.load %arg14[%c0_49, %c0_50, %c0_51] : memref<1x16x128xf32, #tpu.memory_space<vmem>>, vector<1x16x128xf32>
      %60 = vector.shape_cast %59 : vector<1x16x128xf32> to vector<16x128xf32>
      %61 = vector.shape_cast %58 : vector<16x128xf32> to vector<1x16x128xf32>
      tpu.vector_store %arg14[%c0_49, %c0_50, %c0_51], %61 {strides = array<i32>} : memref<1x16x128xf32, #tpu.memory_space<vmem>>, vector<1x16x128xf32>,
    } else {
    }
    return
  }
  func.func @transform_0(%arg0: i32, %arg1: i32) -> (i32, i32, i32) {
    %c0_i32 = arith.constant 0 : i32
    %c0_i32_0 = arith.constant 0 : i32
    %c0_i32_1 = arith.constant 0 : i32
    return %arg0, %c0_i32, %c0_i32_0 : i32, i32, i32
  }
  func.func @transform_1(%arg0: i32, %arg1: i32) -> (i32, i32, i32) {
    %c0_i32 = arith.constant 0 : i32
    %c0_i32_0 = arith.constant 0 : i32
    %c0_i32_1 = arith.constant 0 : i32
    return %arg0, %c0_i32, %c0_i32_0 : i32, i32, i32
  }
  func.func @transform_2(%arg0: i32, %arg1: i32) -> (i32, i32, i32) {
    %c0_i32 = arith.constant 0 : i32
    %c0_i32_0 = arith.constant 0 : i32
    %c0_i32_1 = arith.constant 0 : i32
    return %arg0, %c0_i32, %c0_i32_0 : i32, i32, i32
  }
  func.func @transform_3(%arg0: i32, %arg1: i32) -> (i32, i32) {
    %c0_i32 = arith.constant 0 : i32
    %c0_i32_0 = arith.constant 0 : i32
    %c0_i32_1 = arith.constant 0 : i32
    return %c0_i32, %c0_i32_0 : i32, i32
  }
  func.func @transform_4(%arg0: i32, %arg1: i32) -> (i32, i32, i32) {
    %c0_i32 = arith.constant 0 : i32
    %c0_i32_0 = arith.constant 0 : i32
    %c0_i32_1 = arith.constant 0 : i32
    return %arg1, %c0_i32, %c0_i32_0 : i32, i32, i32
  }
  func.func @transform_5(%arg0: i32, %arg1: i32) -> (i32, i32, i32) {
    %c0_i32 = arith.constant 0 : i32
    %c0_i32_0 = arith.constant 0 : i32
    %c0_i32_1 = arith.constant 0 : i32
    return %arg1, %c0_i32, %c0_i32_0 : i32, i32, i32
  }
  func.func @transform_6(%arg0: i32, %arg1: i32) -> (i32, i32, i32) {
    %c0_i32 = arith.constant 0 : i32
    %c0_i32_0 = arith.constant 0 : i32
    %c0_i32_1 = arith.constant 0 : i32
    return %arg1, %c0_i32, %c0_i32_0 : i32, i32, i32
  }
  func.func @transform_7(%arg0: i32, %arg1: i32) -> (i32, i32, i32) {
    %c0_i32 = arith.constant 0 : i32
    %c0_i32_0 = arith.constant 0 : i32
    %c0_i32_1 = arith.constant 0 : i32
    return %arg1, %c0_i32, %c0_i32_0 : i32, i32, i32
  }
  func.func @transform_8(%arg0: i32, %arg1: i32) -> (i32, i32, i32) {
    %c0_i32 = arith.constant 0 : i32
    %c0_i32_0 = arith.constant 0 : i32
    %c0_i32_1 = arith.constant 0 : i32
    return %arg1, %c0_i32, %c0_i32_0 : i32, i32, i32
  }
  func.func @transform_9(%arg0: i32, %arg1: i32) -> (i32, i32, i32) {
    %c0_i32 = arith.constant 0 : i32
    %c0_i32_0 = arith.constant 0 : i32
    %c0_i32_1 = arith.constant 0 : i32
    return %arg1, %c0_i32, %c0_i32_0 : i32, i32, i32
  }
  func.func @transform_10(%arg0: i32, %arg1: i32) -> (i32, i32, i32) {
    %c0_i32 = arith.constant 0 : i32
    %c0_i32_0 = arith.constant 0 : i32
    %c0_i32_1 = arith.constant 0 : i32
    return %arg1, %c0_i32, %c0_i32_0 : i32, i32, i32
  }
  func.func @transform_11(%arg0: i32, %arg1: i32) -> (i32, i32) {
    %c0_i32 = arith.constant 0 : i32
    %c0_i32_0 = arith.constant 0 : i32
    %c0_i32_1 = arith.constant 0 : i32
    return %c0_i32, %c0_i32_0 : i32, i32
  }
  func.func @transform_12(%arg0: i32, %arg1: i32) -> (i32, i32, i32) {
    %c0_i32 = arith.constant 0 : i32
    %c0_i32_0 = arith.constant 0 : i32
    %c0_i32_1 = arith.constant 0 : i32
    return %arg0, %c0_i32, %c0_i32_0 : i32, i32, i32
  }
}

</mosaic_0001>

<llo_original>
// kernel: tpu_custom_call.1
$region0: #{tpu_custom_call.1}
  #allocation0 [shape = 'u32[]', space=smem, size = 0x4, offset = 0x4, fixed_abs, tag = 'smem constant byte address 0x4 - core index']
  #allocation1 [shape = 'u32[72,128]{1,0:T(1,128)}', space=vmem, size = 0x9000, scoped, tag = 'internal scratch']
  #allocation2 [shape = 'f32[16,128]{1,0:T(8,128)}', space=vmem, size = 0x2000, scoped, tag = 'scratch operand']
  %s0 = inlined_call_operand.vmem [shape: f32[2,16,128], index: 0, kind: input, shape index: {}]
  %s1 = inlined_call_operand.vmem [shape: f32[2,16,128], index: 1, kind: input, shape index: {}]
  %s2 = inlined_call_operand.vmem [shape: f32[2,16,128], index: 2, kind: input, shape index: {}]
  %s3 = inlined_call_operand.vmem [shape: f32[16,16], index: 3, kind: input, shape index: {}]
  %s4 = inlined_call_operand.vmem [shape: f32[4,128,32], index: 4, kind: input, shape index: {}]
  %s5 = inlined_call_operand.vmem [shape: f32[4,128,32], index: 5, kind: input, shape index: {}]
  %s6 = inlined_call_operand.vmem [shape: f32[4,128,32], index: 6, kind: input, shape index: {}]
  %s7 = inlined_call_operand.vmem [shape: f32[4,1,32], index: 7, kind: input, shape index: {}]
  %s8 = inlined_call_operand.vmem [shape: f32[4,1,32], index: 8, kind: input, shape index: {}]
  %s9 = inlined_call_operand.vmem [shape: f32[4,1,32], index: 9, kind: input, shape index: {}]
  %s10 = inlined_call_operand.vmem [shape: f32[4,32,128], index: 10, kind: input, shape index: {}]
  %s11 = inlined_call_operand.vmem [shape: f32[1,128], index: 11, kind: input, shape index: {}]
  %s12 = inlined_call_operand.hbm [shape: f32[2,16,128], index: 12, kind: output, shape index: {}]
  %s13 = sld [smem:[#allocation0]]
  $region89: #{tpu_custom_call.1} parent=0
    _
  %s15 = ssub.s32 1, %s13
  %s16 = scalar_select 0, %s15, %s13
  $region1: #{tpu_custom_call.1} parent=0
    #allocation3 [shape = 'u8[16384]{0}', space=vmem, size = 0x4000, scoped, tag = 'output window, operand 0']
    #allocation4 [shape = 's32[2]{0}', space=sflag, size = 0x8, scoped, tag = 'scoped memory for tpu_custom_call.1']
    %17 = vsyncpa [#allocation4], 0
    %s18 = scalar_lea.sflag [#allocation4], 1
    %19 = vsyncpa %s18, 0
    loop: start=0, step=1, limit=10
    $region2: #{tpu_custom_call.1} parent=1 // loop_pre_header
      _
    $region3: #{tpu_custom_call.1} parent=1 // loop_header
      %s21 = sphi 0, %s25
      %p22 = scmp.ge.s32.totalorder %s21, 10
      %s28 = sphi 0, %s40
      %s29 = sphi 0, %s36
      %s30 = sphi 0, %s28
      %s31 = sphi 0, %s29
      %s32 = sphi 0, %s30
      %s33 = sphi 0, %s31
      %s43 = sphi 0, %s45
      %s46 = sphi 0, %s43
      %s47 = sphi 0, %s46
      %s63 = sphi 0, %s47
      %s69 = sphi 0, %s71
      %s72 = sphi 0, %s69
      %s73 = sphi 0, %s72
      %s89 = sphi 0, %s73
      %s95 = sphi 0, %s97
      %s98 = sphi 0, %s95
      %s99 = sphi 0, %s98
      %s115 = sphi 0, %s99
      %s119 = sphi 0, %s119
      %s121 = sphi 0, %s119
      %s122 = sphi 0, %s121
      %s136 = sphi 0, %s122
      %s142 = sphi 0, %s144
      %s145 = sphi 0, %s142
      %s146 = sphi 0, %s145
      %s162 = sphi 0, %s146
      %s168 = sphi 0, %s170
      %s171 = sphi 0, %s168
      %s172 = sphi 0, %s171
      %s188 = sphi 0, %s172
      %s194 = sphi 0, %s196
      %s197 = sphi 0, %s194
      %s198 = sphi 0, %s197
      %s214 = sphi 0, %s198
      %s220 = sphi 0, %s222
      %s223 = sphi 0, %s220
      %s224 = sphi 0, %s223
      %s240 = sphi 0, %s224
      %s246 = sphi 0, %s248
      %s249 = sphi 0, %s246
      %s250 = sphi 0, %s249
      %s266 = sphi 0, %s250
      %s272 = sphi 0, %s274
      %s275 = sphi 0, %s272
      %s276 = sphi 0, %s275
      %s292 = sphi 0, %s276
      %s298 = sphi 0, %s300
      %s301 = sphi 0, %s298
      %s302 = sphi 0, %s301
      %s318 = sphi 0, %s302
      %s322 = sphi 0, %s322
      %s324 = sphi 0, %s322
      %s325 = sphi 0, %s324
      %s339 = sphi 0, %s325
      %s345 = sphi 0, %s347
      %s348 = sphi 0, %s345
      %s349 = sphi 0, %s348
      %s365 = sphi 0, %s349
    $region4: #{tpu_custom_call.1} parent=1 // loop_header_branch
      %24 = sbr.rel (%p22) target = $region8
    $region5: #{tpu_custom_call.1} parent=1 // loop_body
      %s26 = ssub.s32 %s21, 1
      %s27 = ssub.s32 %s21, 2
      %s34 = sadd.s32 1, %s29
      %p35 = scmp.ge.s32.totalorder %s34, 4
      %s36 = scalar_select %p35, 0, %s34
      %s37 = sadd.s32 1, %s28
      %s38 = scalar_select %p35, %s37, %s28
      %p39 = scmp.ge.s32.totalorder %s38, 2
      %s40 = scalar_select %p39, 0, %s38
      %s41 = ssub.s32 %s28, %s40
      %p42 = scmp.eq.s32.totalorder %s41, 0
      %s44 = sadd.s32 %s43, 1
      %s45 = scalar_select %p42, %s43, %s44
      %p48 = pneg %p42
      %p49 = scmp.eq.s32.totalorder %s21, 7
      %p50 = por %p48, %p49
      %p51 = scmp.ne.s32.totalorder %s43, %s46
      %p52 = scmp.eq.s32.totalorder %s21, 0
      %p53 = por %p51, %p52
      %p54 = scmp.ne.s32.totalorder %s43, %s46
      %p55 = scmp.eq.s32.totalorder %s26, 7
      %p56 = por %p54, %p55
      %p57 = scmp.ne.s32.totalorder %s46, %s47
      %p58 = scmp.eq.s32.totalorder %s26, 0
      %p59 = por %p57, %p58
      %p60 = scmp.ne.s32.totalorder %s46, %s47
      %p61 = scmp.eq.s32.totalorder %s27, 7
      %p62 = por %p60, %p61
      %p64 = scmp.ne.s32.totalorder %s47, %s63
      %p65 = scmp.eq.s32.totalorder %s27, 0
      %p66 = por %p64, %p65
      %s67 = ssub.s32 %s28, %s40
      %p68 = scmp.eq.s32.totalorder %s67, 0
      %s70 = sadd.s32 %s69, 1
      %s71 = scalar_select %p68, %s69, %s70
      %p74 = pneg %p68
      %p75 = scmp.eq.s32.totalorder %s21, 7
      %p76 = por %p74, %p75
      %p77 = scmp.ne.s32.totalorder %s69, %s72
      %p78 = scmp.eq.s32.totalorder %s21, 0
      %p79 = por %p77, %p78
      %p80 = scmp.ne.s32.totalorder %s69, %s72
      %p81 = scmp.eq.s32.totalorder %s26, 7
      %p82 = por %p80, %p81
      %p83 = scmp.ne.s32.totalorder %s72, %s73
      %p84 = scmp.eq.s32.totalorder %s26, 0
      %p85 = por %p83, %p84
      %p86 = scmp.ne.s32.totalorder %s72, %s73
      %p87 = scmp.eq.s32.totalorder %s27, 7
      %p88 = por %p86, %p87
      %p90 = scmp.ne.s32.totalorder %s73, %s89
      %p91 = scmp.eq.s32.totalorder %s27, 0
      %p92 = por %p90, %p91
      %s93 = ssub.s32 %s28, %s40
      %p94 = scmp.eq.s32.totalorder %s93, 0
      %s96 = sadd.s32 %s95, 1
      %s97 = scalar_select %p94, %s95, %s96
      %p100 = pneg %p94
      %p101 = scmp.eq.s32.totalorder %s21, 7
      %p102 = por %p100, %p101
      %p103 = scmp.ne.s32.totalorder %s95, %s98
      %p104 = scmp.eq.s32.totalorder %s21, 0
      %p105 = por %p103, %p104
      %p106 = scmp.ne.s32.totalorder %s95, %s98
      %p107 = scmp.eq.s32.totalorder %s26, 7
      %p108 = por %p106, %p107
      %p109 = scmp.ne.s32.totalorder %s98, %s99
      %p110 = scmp.eq.s32.totalorder %s26, 0
      %p111 = por %p109, %p110
      %p112 = scmp.ne.s32.totalorder %s98, %s99
      %p113 = scmp.eq.s32.totalorder %s27, 7
      %p114 = por %p112, %p113
      %p116 = scmp.ne.s32.totalorder %s99, %s115
      %p117 = scmp.eq.s32.totalorder %s27, 0
      %p118 = por %p116, %p117
      %s120 = sadd.s32 %s119, 1
      %p123 = scmp.eq.s32.totalorder %s21, 7
      %p124 = scmp.ne.s32.totalorder %s119, %s121
      %p125 = scmp.eq.s32.totalorder %s21, 0
      %p126 = por %p124, %p125
      %p127 = scmp.ne.s32.totalorder %s119, %s121
      %p128 = scmp.eq.s32.totalorder %s26, 7
      %p129 = por %p127, %p128
      %p130 = scmp.ne.s32.totalorder %s121, %s122
      %p131 = scmp.eq.s32.totalorder %s26, 0
      %p132 = por %p130, %p131
      %p133 = scmp.ne.s32.totalorder %s121, %s122
      %p134 = scmp.eq.s32.totalorder %s27, 7
      %p135 = por %p133, %p134
      %p137 = scmp.ne.s32.totalorder %s122, %s136
      %p138 = scmp.eq.s32.totalorder %s27, 0
      %p139 = por %p137, %p138
      %s140 = ssub.s32 %s29, %s36
      %p141 = scmp.eq.s32.totalorder %s140, 0
      %s143 = sadd.s32 %s142, 1
      %s144 = scalar_select %p141, %s142, %s143
      %p147 = pneg %p141
      %p148 = scmp.eq.s32.totalorder %s21, 7
      %p149 = por %p147, %p148
      %p150 = scmp.ne.s32.totalorder %s142, %s145
      %p151 = scmp.eq.s32.totalorder %s21, 0
      %p152 = por %p150, %p151
      %p153 = scmp.ne.s32.totalorder %s142, %s145
      %p154 = scmp.eq.s32.totalorder %s26, 7
      %p155 = por %p153, %p154
      %p156 = scmp.ne.s32.totalorder %s145, %s146
      %p157 = scmp.eq.s32.totalorder %s26, 0
      %p158 = por %p156, %p157
      %p159 = scmp.ne.s32.totalorder %s145, %s146
      %p160 = scmp.eq.s32.totalorder %s27, 7
      %p161 = por %p159, %p160
      %p163 = scmp.ne.s32.totalorder %s146, %s162
      %p164 = scmp.eq.s32.totalorder %s27, 0
      %p165 = por %p163, %p164
      %s166 = ssub.s32 %s29, %s36
      %p167 = scmp.eq.s32.totalorder %s166, 0
      %s169 = sadd.s32 %s168, 1
      %s170 = scalar_select %p167, %s168, %s169
      %p173 = pneg %p167
      %p174 = scmp.eq.s32.totalorder %s21, 7
      %p175 = por %p173, %p174
      %p176 = scmp.ne.s32.totalorder %s168, %s171
      %p177 = scmp.eq.s32.totalorder %s21, 0
      %p178 = por %p176, %p177
      %p179 = scmp.ne.s32.totalorder %s168, %s171
      %p180 = scmp.eq.s32.totalorder %s26, 7
      %p181 = por %p179, %p180
      %p182 = scmp.ne.s32.totalorder %s171, %s172
      %p183 = scmp.eq.s32.totalorder %s26, 0
      %p184 = por %p182, %p183
      %p185 = scmp.ne.s32.totalorder %s171, %s172
      %p186 = scmp.eq.s32.totalorder %s27, 7
      %p187 = por %p185, %p186
      %p189 = scmp.ne.s32.totalorder %s172, %s188
      %p190 = scmp.eq.s32.totalorder %s27, 0
      %p191 = por %p189, %p190
      %s192 = ssub.s32 %s29, %s36
      %p193 = scmp.eq.s32.totalorder %s192, 0
      %s195 = sadd.s32 %s194, 1
      %s196 = scalar_select %p193, %s194, %s195
      %p199 = pneg %p193
      %p200 = scmp.eq.s32.totalorder %s21, 7
      %p201 = por %p199, %p200
      %p202 = scmp.ne.s32.totalorder %s194, %s197
      %p203 = scmp.eq.s32.totalorder %s21, 0
      %p204 = por %p202, %p203
      %p205 = scmp.ne.s32.totalorder %s194, %s197
      %p206 = scmp.eq.s32.totalorder %s26, 7
      %p207 = por %p205, %p206
      %p208 = scmp.ne.s32.totalorder %s197, %s198
      %p209 = scmp.eq.s32.totalorder %s26, 0
      %p210 = por %p208, %p209
      %p211 = scmp.ne.s32.totalorder %s197, %s198
      %p212 = scmp.eq.s32.totalorder %s27, 7
      %p213 = por %p211, %p212
      %p215 = scmp.ne.s32.totalorder %s198, %s214
      %p216 = scmp.eq.s32.totalorder %s27, 0
      %p217 = por %p215, %p216
      %s218 = ssub.s32 %s29, %s36
      %p219 = scmp.eq.s32.totalorder %s218, 0
      %s221 = sadd.s32 %s220, 1
      %s222 = scalar_select %p219, %s220, %s221
      %p225 = pneg %p219
      %p226 = scmp.eq.s32.totalorder %s21, 7
      %p227 = por %p225, %p226
      %p228 = scmp.ne.s32.totalorder %s220, %s223
      %p229 = scmp.eq.s32.totalorder %s21, 0
      %p230 = por %p228, %p229
      %p231 = scmp.ne.s32.totalorder %s220, %s223
      %p232 = scmp.eq.s32.totalorder %s26, 7
      %p233 = por %p231, %p232
      %p234 = scmp.ne.s32.totalorder %s223, %s224
      %p235 = scmp.eq.s32.totalorder %s26, 0
      %p236 = por %p234, %p235
      %p237 = scmp.ne.s32.totalorder %s223, %s224
      %p238 = scmp.eq.s32.totalorder %s27, 7
      %p239 = por %p237, %p238
      %p241 = scmp.ne.s32.totalorder %s224, %s240
      %p242 = scmp.eq.s32.totalorder %s27, 0
      %p243 = por %p241, %p242
      %s244 = ssub.s32 %s29, %s36
      %p245 = scmp.eq.s32.totalorder %s244, 0
      %s247 = sadd.s32 %s246, 1
      %s248 = scalar_select %p245, %s246, %s247
      %p251 = pneg %p245
      %p252 = scmp.eq.s32.totalorder %s21, 7
      %p253 = por %p251, %p252
      %p254 = scmp.ne.s32.totalorder %s246, %s249
      %p255 = scmp.eq.s32.totalorder %s21, 0
      %p256 = por %p254, %p255
      %p257 = scmp.ne.s32.totalorder %s246, %s249
      %p258 = scmp.eq.s32.totalorder %s26, 7
      %p259 = por %p257, %p258
      %p260 = scmp.ne.s32.totalorder %s249, %s250
      %p261 = scmp.eq.s32.totalorder %s26, 0
      %p262 = por %p260, %p261
      %p263 = scmp.ne.s32.totalorder %s249, %s250
      %p264 = scmp.eq.s32.totalorder %s27, 7
      %p265 = por %p263, %p264
      %p267 = scmp.ne.s32.totalorder %s250, %s266
      %p268 = scmp.eq.s32.totalorder %s27, 0
      %p269 = por %p267, %p268
      %s270 = ssub.s32 %s29, %s36
      %p271 = scmp.eq.s32.totalorder %s270, 0
      %s273 = sadd.s32 %s272, 1
      %s274 = scalar_select %p271, %s272, %s273
      %p277 = pneg %p271
      %p278 = scmp.eq.s32.totalorder %s21, 7
      %p279 = por %p277, %p278
      %p280 = scmp.ne.s32.totalorder %s272, %s275
      %p281 = scmp.eq.s32.totalorder %s21, 0
      %p282 = por %p280, %p281
      %p283 = scmp.ne.s32.totalorder %s272, %s275
      %p284 = scmp.eq.s32.totalorder %s26, 7
      %p285 = por %p283, %p284
      %p286 = scmp.ne.s32.totalorder %s275, %s276
      %p287 = scmp.eq.s32.totalorder %s26, 0
      %p288 = por %p286, %p287
      %p289 = scmp.ne.s32.totalorder %s275, %s276
      %p290 = scmp.eq.s32.totalorder %s27, 7
      %p291 = por %p289, %p290
      %p293 = scmp.ne.s32.totalorder %s276, %s292
      %p294 = scmp.eq.s32.totalorder %s27, 0
      %p295 = por %p293, %p294
      %s296 = ssub.s32 %s29, %s36
      %p297 = scmp.eq.s32.totalorder %s296, 0
      %s299 = sadd.s32 %s298, 1
      %s300 = scalar_select %p297, %s298, %s299
      %p303 = pneg %p297
      %p304 = scmp.eq.s32.totalorder %s21, 7
      %p305 = por %p303, %p304
      %p306 = scmp.ne.s32.totalorder %s298, %s301
      %p307 = scmp.eq.s32.totalorder %s21, 0
      %p308 = por %p306, %p307
      %p309 = scmp.ne.s32.totalorder %s298, %s301
      %p310 = scmp.eq.s32.totalorder %s26, 7
      %p311 = por %p309, %p310
      %p312 = scmp.ne.s32.totalorder %s301, %s302
      %p313 = scmp.eq.s32.totalorder %s26, 0
      %p314 = por %p312, %p313
      %p315 = scmp.ne.s32.totalorder %s301, %s302
      %p316 = scmp.eq.s32.totalorder %s27, 7
      %p317 = por %p315, %p316
      %p319 = scmp.ne.s32.totalorder %s302, %s318
      %p320 = scmp.eq.s32.totalorder %s27, 0
      %p321 = por %p319, %p320
      %s323 = sadd.s32 %s322, 1
      %p326 = scmp.eq.s32.totalorder %s21, 7
      %p327 = scmp.ne.s32.totalorder %s322, %s324
      %p328 = scmp.eq.s32.totalorder %s21, 0
      %p329 = por %p327, %p328
      %p330 = scmp.ne.s32.totalorder %s322, %s324
      %p331 = scmp.eq.s32.totalorder %s26, 7
      %p332 = por %p330, %p331
      %p333 = scmp.ne.s32.totalorder %s324, %s325
      %p334 = scmp.eq.s32.totalorder %s26, 0
      %p335 = por %p333, %p334
      %p336 = scmp.ne.s32.totalorder %s324, %s325
      %p337 = scmp.eq.s32.totalorder %s27, 7
      %p338 = por %p336, %p337
      %p340 = scmp.ne.s32.totalorder %s325, %s339
      %p341 = scmp.eq.s32.totalorder %s27, 0
      %p342 = por %p340, %p341
      %s343 = ssub.s32 %s28, %s40
      %p344 = scmp.eq.s32.totalorder %s343, 0
      %s346 = sadd.s32 %s345, 1
      %s347 = scalar_select %p344, %s345, %s346
      %p350 = pneg %p344
      %p351 = scmp.eq.s32.totalorder %s21, 7
      %p352 = por %p350, %p351
      %p353 = scmp.ne.s32.totalorder %s345, %s348
      %p354 = scmp.eq.s32.totalorder %s21, 0
      %p355 = por %p353, %p354
      %p356 = scmp.ne.s32.totalorder %s345, %s348
      %p357 = scmp.eq.s32.totalorder %s26, 7
      %p358 = por %p356, %p357
      %p359 = scmp.ne.s32.totalorder %s348, %s349
      %p360 = scmp.eq.s32.totalorder %s26, 0
      %p361 = por %p359, %p360
      %p362 = scmp.ne.s32.totalorder %s348, %s349
      %p363 = scmp.eq.s32.totalorder %s27, 7
      %p364 = por %p362, %p363
      %p366 = scmp.ne.s32.totalorder %s349, %s365
      %p367 = scmp.eq.s32.totalorder %s27, 0
      %p368 = por %p366, %p367
      %p369 = scmp.le.s32.totalorder 1, %s21
      %p370 = scmp.lt.s32.totalorder %s21, 9
      %p371 = pnand %p369, %p370
      %p372 = pneg %p371
      // Predicated region
      $region9: #{tpu_custom_call.1} parent=5 // pred_check
        _
      $region10: #{tpu_custom_call.1} parent=5 // pred_check_branch
        %374 = sbr.rel (%p371) target = $region12
      $region11: #{tpu_custom_call.1} parent=5 // pred_region
        %s375 = ssub.s32 %s21, 1
        // Predicated region
        $region13: #{tpu_custom_call.1} parent=11 // pred_check
          %p376 = pneg %p132
        $region14: #{tpu_custom_call.1} parent=11 // pred_check_branch
          %378 = sbr.rel (%p376) target = $region16
        $region15: #{tpu_custom_call.1} parent=11 // pred_region
          _
        $region16: #{tpu_custom_call.1} parent=11 // pred_fallthru
          _
        // Predicated region
        $region17: #{tpu_custom_call.1} parent=11 // pred_check
          %p379 = pneg %p335
        $region18: #{tpu_custom_call.1} parent=11 // pred_check_branch
          %381 = sbr.rel (%p379) target = $region20
        $region19: #{tpu_custom_call.1} parent=11 // pred_region
          _
        $region20: #{tpu_custom_call.1} parent=11 // pred_fallthru
          _
      $region12: #{tpu_custom_call.1} parent=5 // pred_fallthru
        _
      %p382 = scmp.lt.s32.totalorder %s21, 8
      // Predicated region
      $region21: #{tpu_custom_call.1} parent=5 // pred_check
        %p383 = pneg %p382
      $region22: #{tpu_custom_call.1} parent=5 // pred_check_branch
        %385 = sbr.rel (%p383) target = $region24
      $region23: #{tpu_custom_call.1} parent=5 // pred_region
        // Predicated region
        $region25: #{tpu_custom_call.1} parent=23 // pred_check
          %p386 = pneg %p53
        $region26: #{tpu_custom_call.1} parent=23 // pred_check_branch
          %388 = sbr.rel (%p386) target = $region28
        $region27: #{tpu_custom_call.1} parent=23 // pred_region
          %p389 = scmp.lt.s32.totalorder %s28, 1
          %s390 = scalar_select %p389, %s28, 1
          %s391 = smul.addr %s390, 2
          %s392 = smul.addr %s391, 8
          %s393 = scalar_lea.vmem %s0, %s392
        $region28: #{tpu_custom_call.1} parent=23 // pred_fallthru
          _
        // Predicated region
        $region29: #{tpu_custom_call.1} parent=23 // pred_check
          %p394 = pneg %p79
        $region30: #{tpu_custom_call.1} parent=23 // pred_check_branch
          %396 = sbr.rel (%p394) target = $region32
        $region31: #{tpu_custom_call.1} parent=23 // pred_region
          %p397 = scmp.lt.s32.totalorder %s28, 1
          %s398 = scalar_select %p397, %s28, 1
          %s399 = smul.addr %s398, 2
          %s400 = smul.addr %s399, 8
          %s401 = scalar_lea.vmem %s1, %s400
        $region32: #{tpu_custom_call.1} parent=23 // pred_fallthru
          _
        // Predicated region
        $region33: #{tpu_custom_call.1} parent=23 // pred_check
          %p402 = pneg %p105
        $region34: #{tpu_custom_call.1} parent=23 // pred_check_branch
          %404 = sbr.rel (%p402) target = $region36
        $region35: #{tpu_custom_call.1} parent=23 // pred_region
          %p405 = scmp.lt.s32.totalorder %s28, 1
          %s406 = scalar_select %p405, %s28, 1
          %s407 = smul.addr %s406, 2
          %s408 = smul.addr %s407, 8
          %s409 = scalar_lea.vmem %s2, %s408
        $region36: #{tpu_custom_call.1} parent=23 // pred_fallthru
          _
        // Predicated region
        $region37: #{tpu_custom_call.1} parent=23 // pred_check
          %p410 = pneg %p152
        $region38: #{tpu_custom_call.1} parent=23 // pred_check_branch
          %412 = sbr.rel (%p410) target = $region40
        $region39: #{tpu_custom_call.1} parent=23 // pred_region
          %p413 = scmp.lt.s32.totalorder %s29, 3
          %s414 = scalar_select %p413, %s29, 3
          %s415 = smul.addr %s414, 16
          %s416 = smul.addr %s415, 8
          %s417 = scalar_lea.vmem %s4, %s416
        $region40: #{tpu_custom_call.1} parent=23 // pred_fallthru
          _
        // Predicated region
        $region41: #{tpu_custom_call.1} parent=23 // pred_check
          %p418 = pneg %p178
        $region42: #{tpu_custom_call.1} parent=23 // pred_check_branch
          %420 = sbr.rel (%p418) target = $region44
        $region43: #{tpu_custom_call.1} parent=23 // pred_region
          %p421 = scmp.lt.s32.totalorder %s29, 3
          %s422 = scalar_select %p421, %s29, 3
          %s423 = smul.addr %s422, 16
          %s424 = smul.addr %s423, 8
          %s425 = scalar_lea.vmem %s5, %s424
        $region44: #{tpu_custom_call.1} parent=23 // pred_fallthru
          _
        // Predicated region
        $region45: #{tpu_custom_call.1} parent=23 // pred_check
          %p426 = pneg %p204
        $region46: #{tpu_custom_call.1} parent=23 // pred_check_branch
          %428 = sbr.rel (%p426) target = $region48
        $region47: #{tpu_custom_call.1} parent=23 // pred_region
          %p429 = scmp.lt.s32.totalorder %s29, 3
          %s430 = scalar_select %p429, %s29, 3
          %s431 = smul.addr %s430, 16
          %s432 = smul.addr %s431, 8
          %s433 = scalar_lea.vmem %s6, %s432
        $region48: #{tpu_custom_call.1} parent=23 // pred_fallthru
          _
        // Predicated region
        $region49: #{tpu_custom_call.1} parent=23 // pred_check
          %p434 = pneg %p230
        $region50: #{tpu_custom_call.1} parent=23 // pred_check_branch
          %436 = sbr.rel (%p434) target = $region52
        $region51: #{tpu_custom_call.1} parent=23 // pred_region
          %p437 = scmp.lt.s32.totalorder %s29, 3
          %s438 = scalar_select %p437, %s29, 3
          %s439 = scalar_lea.vmem %s7, %s438
        $region52: #{tpu_custom_call.1} parent=23 // pred_fallthru
          _
        // Predicated region
        $region53: #{tpu_custom_call.1} parent=23 // pred_check
          %p440 = pneg %p256
        $region54: #{tpu_custom_call.1} parent=23 // pred_check_branch
          %442 = sbr.rel (%p440) target = $region56
        $region55: #{tpu_custom_call.1} parent=23 // pred_region
          %p443 = scmp.lt.s32.totalorder %s29, 3
          %s444 = scalar_select %p443, %s29, 3
          %s445 = scalar_lea.vmem %s8, %s444
        $region56: #{tpu_custom_call.1} parent=23 // pred_fallthru
          _
        // Predicated region
        $region57: #{tpu_custom_call.1} parent=23 // pred_check
          %p446 = pneg %p282
        $region58: #{tpu_custom_call.1} parent=23 // pred_check_branch
          %448 = sbr.rel (%p446) target = $region60
        $region59: #{tpu_custom_call.1} parent=23 // pred_region
          %p449 = scmp.lt.s32.totalorder %s29, 3
          %s450 = scalar_select %p449, %s29, 3
          %s451 = scalar_lea.vmem %s9, %s450
        $region60: #{tpu_custom_call.1} parent=23 // pred_fallthru
          _
        // Predicated region
        $region61: #{tpu_custom_call.1} parent=23 // pred_check
          %p452 = pneg %p308
        $region62: #{tpu_custom_call.1} parent=23 // pred_check_branch
          %454 = sbr.rel (%p452) target = $region64
        $region63: #{tpu_custom_call.1} parent=23 // pred_region
          %p455 = scmp.lt.s32.totalorder %s29, 3
          %s456 = scalar_select %p455, %s29, 3
          %s457 = smul.addr %s456, 4
          %s458 = smul.addr %s457, 8
          %s459 = scalar_lea.vmem %s10, %s458
        $region64: #{tpu_custom_call.1} parent=23 // pred_fallthru
          _
      $region24: #{tpu_custom_call.1} parent=5 // pred_fallthru
        _
      %p460 = scmp.le.s32.totalorder 1, %s21
      %p461 = scmp.lt.s32.totalorder %s21, 9
      %p462 = pnand %p460, %p461
      %p463 = pneg %p462
      // Predicated region
      $region65: #{tpu_custom_call.1} parent=5 // pred_check
        _
      $region66: #{tpu_custom_call.1} parent=5 // pred_check_branch
        %465 = sbr.rel (%p462) target = $region68
      $region67: #{tpu_custom_call.1} parent=5 // pred_region
        %s466 = ssub.s32 %s21, 1
        %p467 = scmp.lt.s32.totalorder %s30, 1
        %s468 = scalar_select %p467, %s30, 1
        %s469 = smul.addr %s468, 2
        %s470 = smul.addr %s469, 8
        %s471 = scalar_lea.vmem %s0, %s470
        %p472 = pneg %p59
        %p473 = pneg %p56
        %p474 = scmp.lt.s32.totalorder %s30, 1
        %s475 = scalar_select %p474, %s30, 1
        %s476 = smul.addr %s475, 2
        %s477 = smul.addr %s476, 8
        %s478 = scalar_lea.vmem %s1, %s477
        %p479 = pneg %p85
        %p480 = pneg %p82
        %p481 = scmp.lt.s32.totalorder %s30, 1
        %s482 = scalar_select %p481, %s30, 1
        %s483 = smul.addr %s482, 2
        %s484 = smul.addr %s483, 8
        %s485 = scalar_lea.vmem %s2, %s484
        %p486 = pneg %p111
        %p487 = pneg %p108
        %p488 = pneg %p132
        %p489 = pneg %p129
        %p490 = scmp.lt.s32.totalorder %s31, 3
        %s491 = scalar_select %p490, %s31, 3
        %s492 = smul.addr %s491, 16
        %s493 = smul.addr %s492, 8
        %s494 = scalar_lea.vmem %s4, %s493
        %p495 = pneg %p158
        %p496 = pneg %p155
        %p497 = scmp.lt.s32.totalorder %s31, 3
        %s498 = scalar_select %p497, %s31, 3
        %s499 = smul.addr %s498, 16
        %s500 = smul.addr %s499, 8
        %s501 = scalar_lea.vmem %s5, %s500
        %p502 = pneg %p184
        %p503 = pneg %p181
        %p504 = scmp.lt.s32.totalorder %s31, 3
        %s505 = scalar_select %p504, %s31, 3
        %s506 = smul.addr %s505, 16
        %s507 = smul.addr %s506, 8
        %s508 = scalar_lea.vmem %s6, %s507
        %p509 = pneg %p210
        %p510 = pneg %p207
        %p511 = scmp.lt.s32.totalorder %s31, 3
        %s512 = scalar_select %p511, %s31, 3
        %s513 = scalar_lea.vmem %s7, %s512
        %p514 = pneg %p236
        %p515 = pneg %p233
        %p516 = scmp.lt.s32.totalorder %s31, 3
        %s517 = scalar_select %p516, %s31, 3
        %s518 = scalar_lea.vmem %s8, %s517
        %p519 = pneg %p262
        %p520 = pneg %p259
        %p521 = scmp.lt.s32.totalorder %s31, 3
        %s522 = scalar_select %p521, %s31, 3
        %s523 = scalar_lea.vmem %s9, %s522
        %p524 = pneg %p288
        %p525 = pneg %p285
        %p526 = scmp.lt.s32.totalorder %s31, 3
        %s527 = scalar_select %p526, %s31, 3
        %s528 = smul.addr %s527, 4
        %s529 = smul.addr %s528, 8
        %s530 = scalar_lea.vmem %s10, %s529
        %p531 = pneg %p314
        %p532 = pneg %p311
        %p533 = pneg %p335
        %p534 = pneg %p332
        %p535 = pneg %p361
        %p536 = pneg %p358
        %s537 = sand.u32 %s348, 1
        %s538 = scalar_lea.sflag [#allocation4], %s537
        %s539 = sand.u32 %s348, 1
        %s540 = smul.addr %s539, 16
        %s541 = scalar_lea.vmem [#allocation3], %s540
        %p542 = scmp.lt.s32.totalorder %s30, 1
        %s543 = scalar_select %p542, %s30, 1
        %s544 = smul.addr %s543, 2
        %s545 = smul.addr %s544, 8
        %s546 = scalar_lea.vmem %s0, %s545
        %p547 = scmp.lt.s32.totalorder %s30, 1
        %s548 = scalar_select %p547, %s30, 1
        %s549 = smul.addr %s548, 2
        %s550 = smul.addr %s549, 8
        %s551 = scalar_lea.vmem %s1, %s550
        %p552 = scmp.lt.s32.totalorder %s30, 1
        %s553 = scalar_select %p552, %s30, 1
        %s554 = smul.addr %s553, 2
        %s555 = smul.addr %s554, 8
        %s556 = scalar_lea.vmem %s2, %s555
        %p557 = scmp.lt.s32.totalorder %s31, 3
        %s558 = scalar_select %p557, %s31, 3
        %s559 = smul.addr %s558, 16
        %s560 = smul.addr %s559, 8
        %s561 = scalar_lea.vmem %s4, %s560
        %p562 = scmp.lt.s32.totalorder %s31, 3
        %s563 = scalar_select %p562, %s31, 3
        %s564 = smul.addr %s563, 16
        %s565 = smul.addr %s564, 8
        %s566 = scalar_lea.vmem %s5, %s565
        %p567 = scmp.lt.s32.totalorder %s31, 3
        %s568 = scalar_select %p567, %s31, 3
        %s569 = smul.addr %s568, 16
        %s570 = smul.addr %s569, 8
        %s571 = scalar_lea.vmem %s6, %s570
        %p572 = scmp.lt.s32.totalorder %s31, 3
        %s573 = scalar_select %p572, %s31, 3
        %s574 = scalar_lea.vmem %s7, %s573
        %p575 = scmp.lt.s32.totalorder %s31, 3
        %s576 = scalar_select %p575, %s31, 3
        %s577 = scalar_lea.vmem %s8, %s576
        %p578 = scmp.lt.s32.totalorder %s31, 3
        %s579 = scalar_select %p578, %s31, 3
        %s580 = scalar_lea.vmem %s9, %s579
        %p581 = scmp.lt.s32.totalorder %s31, 3
        %s582 = scalar_select %p581, %s31, 3
        %s583 = smul.addr %s582, 4
        %s584 = smul.addr %s583, 8
        %s585 = scalar_lea.vmem %s10, %s584
        %p586 = scmp.eq.s32.totalorder %s31, 0
        // Predicated region
        $region69: #{tpu_custom_call.1} parent=67 // pred_check
          %p587 = pneg %p586
        $region70: #{tpu_custom_call.1} parent=67 // pred_check_branch
          %589 = sbr.rel (%p587) target = $region72
        $region71: #{tpu_custom_call.1} parent=67 // pred_region
          %590 = vst [vmem:[#allocation2] sm:$0xff] 0.0
          %591 = vst [vmem:[#allocation2 + $0x8] sm:$0xff] 0.0
        $region72: #{tpu_custom_call.1} parent=67 // pred_fallthru
          _
        %v592 = vld [vmem:[%s546] sm:$0xff]
        %v593 = vld [vmem:[%s546 + $0x8] sm:$0xff]
        %v594 = vld [vmem:[%s551] sm:$0xff]
        %v595 = vld [vmem:[%s551 + $0x8] sm:$0xff]
        %v596 = vld [vmem:[%s556] sm:$0xff]
        %v597 = vld [vmem:[%s556 + $0x8] sm:$0xff]
        %v598 = vld [vmem:[%s561] sm:$0xff]
        %v599 = vld [vmem:[%s561 + $0x8] sm:$0xff]
        %v600 = vld [vmem:[%s561 + $0x10] sm:$0xff]
        %v601 = vld [vmem:[%s561 + $0x18] sm:$0xff]
        %v602 = vld [vmem:[%s561 + $0x20] sm:$0xff]
        %v603 = vld [vmem:[%s561 + $0x28] sm:$0xff]
        %v604 = vld [vmem:[%s561 + $0x30] sm:$0xff]
        %v605 = vld [vmem:[%s561 + $0x38] sm:$0xff]
        %v606 = vld [vmem:[%s561 + $0x40] sm:$0xff]
        %v607 = vld [vmem:[%s561 + $0x48] sm:$0xff]
        %v608 = vld [vmem:[%s561 + $0x50] sm:$0xff]
        %v609 = vld [vmem:[%s561 + $0x58] sm:$0xff]
        %v610 = vld [vmem:[%s561 + $0x60] sm:$0xff]
        %v611 = vld [vmem:[%s561 + $0x68] sm:$0xff]
        %v612 = vld [vmem:[%s561 + $0x70] sm:$0xff]
        %v613 = vld [vmem:[%s561 + $0x78] sm:$0xff]
        %v614 = vld [vmem:[%s574] sm:$0x1]
        %v616 = vperm.slane %v614, 0
        %618 = vmatpush.msra.mxu0 %v613
        %619 = vmatpush.msra.mxu0 %v612
        %620 = vmatpush.msra.mxu0 %v611
        %621 = vmatpush.msra.mxu0 %v610
        %622 = vmatpush.msra.mxu0 %v609
        %623 = vmatpush.msra.mxu0 %v608
        %624 = vmatpush.msra.mxu0 %v607
        %625 = vmatpush.msra.mxu0 %v606
        %626 = vmatpush.msra.mxu0 %v605
        %627 = vmatpush.msra.mxu0 %v604
        %628 = vmatpush.msra.mxu0 %v603
        %629 = vmatpush.msra.mxu0 %v602
        %630 = vmatpush.msra.mxu0 %v601
        %631 = vmatpush.msra.mxu0 %v600
        %632 = vmatpush.msra.mxu0 %v599
        %633 = vmatpush.msra.mxu0 %v598
        %634 = vmatmul.f32.gmra.mxu0 %v592
        %v635 = vpop.f32.mrf.mxu0
        %v636 = vadd.f32 %v616, %v635
        %637 = vmatmul.f32.gmra.mxu0 %v593
        %v638 = vpop.f32.mrf.mxu0
        %v639 = vadd.f32 %v616, %v638
        %640 = vdwg.mxu0
        %v641 = vld [vmem:[%s566] sm:$0xff]
        %v642 = vld [vmem:[%s566 + $0x8] sm:$0xff]
        %v643 = vld [vmem:[%s566 + $0x10] sm:$0xff]
        %v644 = vld [vmem:[%s566 + $0x18] sm:$0xff]
        %v645 = vld [vmem:[%s566 + $0x20] sm:$0xff]
        %v646 = vld [vmem:[%s566 + $0x28] sm:$0xff]
        %v647 = vld [vmem:[%s566 + $0x30] sm:$0xff]
        %v648 = vld [vmem:[%s566 + $0x38] sm:$0xff]
        %v649 = vld [vmem:[%s566 + $0x40] sm:$0xff]
        %v650 = vld [vmem:[%s566 + $0x48] sm:$0xff]
        %v651 = vld [vmem:[%s566 + $0x50] sm:$0xff]
        %v652 = vld [vmem:[%s566 + $0x58] sm:$0xff]
        %v653 = vld [vmem:[%s566 + $0x60] sm:$0xff]
        %v654 = vld [vmem:[%s566 + $0x68] sm:$0xff]
        %v655 = vld [vmem:[%s566 + $0x70] sm:$0xff]
        %v656 = vld [vmem:[%s566 + $0x78] sm:$0xff]
        %v657 = vld [vmem:[%s577] sm:$0x1]
        %v659 = vperm.slane %v657, 0
        %661 = vmatpush.msra.mxu0 %v656
        %662 = vmatpush.msra.mxu0 %v655
        %663 = vmatpush.msra.mxu0 %v654
        %664 = vmatpush.msra.mxu0 %v653
        %665 = vmatpush.msra.mxu0 %v652
        %666 = vmatpush.msra.mxu0 %v651
        %667 = vmatpush.msra.mxu0 %v650
        %668 = vmatpush.msra.mxu0 %v649
        %669 = vmatpush.msra.mxu0 %v648
        %670 = vmatpush.msra.mxu0 %v647
        %671 = vmatpush.msra.mxu0 %v646
        %672 = vmatpush.msra.mxu0 %v645
        %673 = vmatpush.msra.mxu0 %v644
        %674 = vmatpush.msra.mxu0 %v643
        %675 = vmatpush.msra.mxu0 %v642
        %676 = vmatpush.msra.mxu0 %v641
        %677 = vmatmul.f32.gmra.mxu0 %v594
        %v678 = vpop.f32.mrf.mxu0
        %v679 = vadd.f32 %v659, %v678
        %680 = vmatmul.f32.gmra.mxu0 %v595
        %v681 = vpop.f32.mrf.mxu0
        %v682 = vadd.f32 %v659, %v681
        %683 = vdwg.mxu0
        %v684 = vld [vmem:[%s571] sm:$0xff]
        %v685 = vld [vmem:[%s571 + $0x8] sm:$0xff]
        %v686 = vld [vmem:[%s571 + $0x10] sm:$0xff]
        %v687 = vld [vmem:[%s571 + $0x18] sm:$0xff]
        %v688 = vld [vmem:[%s571 + $0x20] sm:$0xff]
        %v689 = vld [vmem:[%s571 + $0x28] sm:$0xff]
        %v690 = vld [vmem:[%s571 + $0x30] sm:$0xff]
        %v691 = vld [vmem:[%s571 + $0x38] sm:$0xff]
        %v692 = vld [vmem:[%s571 + $0x40] sm:$0xff]
        %v693 = vld [vmem:[%s571 + $0x48] sm:$0xff]
        %v694 = vld [vmem:[%s571 + $0x50] sm:$0xff]
        %v695 = vld [vmem:[%s571 + $0x58] sm:$0xff]
        %v696 = vld [vmem:[%s571 + $0x60] sm:$0xff]
        %v697 = vld [vmem:[%s571 + $0x68] sm:$0xff]
        %v698 = vld [vmem:[%s571 + $0x70] sm:$0xff]
        %v699 = vld [vmem:[%s571 + $0x78] sm:$0xff]
        %v700 = vld [vmem:[%s580] sm:$0x1]
        %v702 = vperm.slane %v700, 0
        %704 = vmatpush.msra.mxu0 %v699
        %705 = vmatpush.msra.mxu0 %v698
        %706 = vmatpush.msra.mxu0 %v697
        %707 = vmatpush.msra.mxu0 %v696
        %708 = vmatpush.msra.mxu0 %v695
        %709 = vmatpush.msra.mxu0 %v694
        %710 = vmatpush.msra.mxu0 %v693
        %711 = vmatpush.msra.mxu0 %v692
        %712 = vmatpush.msra.mxu0 %v691
        %713 = vmatpush.msra.mxu0 %v690
        %714 = vmatpush.msra.mxu0 %v689
        %715 = vmatpush.msra.mxu0 %v688
        %716 = vmatpush.msra.mxu0 %v687
        %717 = vmatpush.msra.mxu0 %v686
        %718 = vmatpush.msra.mxu0 %v685
        %719 = vmatpush.msra.mxu0 %v684
        %720 = vmatmul.f32.gmra.mxu0 %v596
        %v721 = vpop.f32.mrf.mxu0
        %v722 = vadd.f32 %v702, %v721
        %723 = vmatmul.f32.gmra.mxu0 %v597
        %v724 = vpop.f32.mrf.mxu0
        %v725 = vadd.f32 %v702, %v724
        %726 = vdwg.mxu0
        %v727 = vmul.f32 %v636, 0.17677669
        %v728 = vmul.f32 %v639, 0.17677669
        %v729 = vld [vmem:[%s3] sm:$0xff]
        %v730 = vld [vmem:[%s3 + $0x8] sm:$0xff]
        %vm731 = vcmask 261120
        %v733 = vsel %vm731, %v727, 0
        %v736 = vsel %vm731, %v728, 0
        %v739 = vsel %vm731, %v679, 0
        %v742 = vsel %vm731, %v682, 0
        %744 = vmatpush.xpose.msra.mxu0 0.0
        %745 = vmatpush.xpose.msra.mxu0 0.0
        %746 = vmatpush.xpose.msra.mxu0 0.0
        %747 = vmatpush.xpose.msra.mxu0 0.0
        %748 = vmatpush.xpose.msra.mxu0 0.0
        %749 = vmatpush.xpose.msra.mxu0 0.0
        %750 = vmatpush.xpose.msra.mxu0 0.0
        %751 = vmatpush.xpose.msra.mxu0 0.0
        %752 = vmatpush.xpose.msra.mxu0 0.0
        %753 = vmatpush.xpose.msra.mxu0 0.0
        %754 = vmatpush.xpose.msra.mxu0 0.0
        %755 = vmatpush.xpose.msra.mxu0 0.0
        %756 = vmatpush.xpose.msra.mxu0 0.0
        %757 = vmatpush.xpose.msra.mxu0 0.0
        %758 = vmatpush.xpose.msra.mxu0 %v742
        %759 = vmatpush.xpose.msra.mxu0 %v739
        %760 = vmatmul.f32.gmra.mxu0 %v733
        %v761 = vpop.f32.mrf.mxu0
        %v762 = vadd.f32 %v729, %v761
        %763 = vmatmul.f32.gmra.mxu0 %v736
        %v764 = vpop.f32.mrf.mxu0
        %v765 = vadd.f32 %v730, %v764
        %766 = vdwg.mxu0
        %vm767 = vcmask 130048
        %v768 = vsel %vm767, %v762, -inf
        %769 = vmax.xlane.f32.xlu0 %v768
        %v770 = vpop.xlane.xlu0 %769
        %v771 = vsel %vm767, %v765, -inf
        %772 = vmax.xlane.f32.xlu0 %v771
        %v773 = vpop.xlane.xlu0 %772
        %v774 = vsub.f32 %v762, %v770
        %v775 = vsub.f32 %v765, %v773
        %v776 = vmul.f32 %v774, 1.442695
        %v777 = vpow.pop %v776
        %v778 = vmul.f32 %v775, 1.442695
        %v779 = vpow.pop %v778
        %v780 = vsel %vm767, %v777, 0.0
        %781 = vadd.xlane.f32.xlu0 %v780
        %v782 = vpop.xlane.xlu0 %781
        %v783 = vsel %vm767, %v779, 0.0
        %784 = vadd.xlane.f32.xlu0 %v783
        %v785 = vpop.xlane.xlu0 %784
        %v786 = vrcp.pop %v782
        %v787 = vmul.f32 %v782, %v786
        %v788 = vsub.f32 1.0, %v787
        %v789 = vmul.f32 %v786, %v788
        %v790 = vadd.f32 %v786, %v789
        %vm791 = vweird.f32 %v782
        %vm792 = vweird.f32 %v786
        %vm793 = vmor %vm791, %vm792
        %v794 = vsel %vm793, %v786, %v790
        %v795 = vand.u32 2147483647, %v782
        %vm796 = vcmp.eq.f32.partialorder %v795, 8.507059e+37
        %v797 = vand.u32 %v782, 2147483648
        %v798 = vor.u32 1.1754944e-38, %v797
        %v799 = vsel %vm796, %v798, %v794
        %v800 = vrcp.pop %v785
        %v801 = vmul.f32 %v785, %v800
        %v802 = vsub.f32 1.0, %v801
        %v803 = vmul.f32 %v800, %v802
        %v804 = vadd.f32 %v800, %v803
        %vm805 = vweird.f32 %v785
        %vm806 = vweird.f32 %v800
        %vm807 = vmor %vm805, %vm806
        %v808 = vsel %vm807, %v800, %v804
        %v809 = vand.u32 2147483647, %v785
        %vm810 = vcmp.eq.f32.partialorder %v809, 8.507059e+37
        %v811 = vand.u32 %v785, 2147483648
        %v812 = vor.u32 1.1754944e-38, %v811
        %v813 = vsel %vm810, %v812, %v808
        %v814 = vmul.f32 %v777, %v799
        %v815 = vmul.f32 %v779, %v813
        %v817 = vsel %vm767, %v814, 0
        %v820 = vsel %vm767, %v815, 0
        %822 = vmatpush.msra.mxu0 0.0
        %823 = vmatpush.msra.mxu0 0.0
        %824 = vmatpush.msra.mxu0 0.0
        %825 = vmatpush.msra.mxu0 0.0
        %826 = vmatpush.msra.mxu0 0.0
        %827 = vmatpush.msra.mxu0 0.0
        %828 = vmatpush.msra.mxu0 0.0
        %829 = vmatpush.msra.mxu0 0.0
        %830 = vmatpush.msra.mxu0 0.0
        %831 = vmatpush.msra.mxu0 0.0
        %832 = vmatpush.msra.mxu0 0.0
        %833 = vmatpush.msra.mxu0 0.0
        %834 = vmatpush.msra.mxu0 0.0
        %835 = vmatpush.msra.mxu0 0.0
        %836 = vmatpush.msra.mxu0 %v725
        %837 = vmatpush.msra.mxu0 %v722
        %838 = vmatmul.f32.gmra.mxu0 %v817
        %v839 = vpop.f32.mrf.mxu0
        %v840 = vadd.f32 0.0, %v839
        %841 = vmatmul.f32.gmra.mxu0 %v820
        %v842 = vpop.f32.mrf.mxu0
        %v843 = vadd.f32 0.0, %v842
        %844 = vdwg.mxu0
        %v845 = vld [vmem:[#allocation2] sm:$0xff]
        %v846 = vld [vmem:[#allocation2 + $0x8] sm:$0xff]
        %v847 = vld [vmem:[%s585] sm:$0xff]
        %v848 = vld [vmem:[%s585 + $0x8] sm:$0xff]
        %v849 = vld [vmem:[%s585 + $0x10] sm:$0xff]
        %v850 = vld [vmem:[%s585 + $0x18] sm:$0xff]
        %v852 = vsel %vm731, %v840, 0
        %v855 = vsel %vm731, %v843, 0
        %857 = vmatpush.msra.mxu0 0.0
        %858 = vmatpush.msra.mxu0 0.0
        %859 = vmatpush.msra.mxu0 0.0
        %860 = vmatpush.msra.mxu0 0.0
        %861 = vmatpush.msra.mxu0 0.0
        %862 = vmatpush.msra.mxu0 0.0
        %863 = vmatpush.msra.mxu0 0.0
        %864 = vmatpush.msra.mxu0 0.0
        %865 = vmatpush.msra.mxu0 0.0
        %866 = vmatpush.msra.mxu0 0.0
        %867 = vmatpush.msra.mxu0 0.0
        %868 = vmatpush.msra.mxu0 0.0
        %869 = vmatpush.msra.mxu0 %v850
        %870 = vmatpush.msra.mxu0 %v849
        %871 = vmatpush.msra.mxu0 %v848
        %872 = vmatpush.msra.mxu0 %v847
        %873 = vmatmul.f32.gmra.mxu0 %v852
        %v874 = vpop.f32.mrf.mxu0
        %v875 = vadd.f32 0.0, %v874
        %876 = vmatmul.f32.gmra.mxu0 %v855
        %v877 = vpop.f32.mrf.mxu0
        %v878 = vadd.f32 0.0, %v877
        %879 = vdwg.mxu0
        %v880 = vadd.f32 %v845, %v875
        %v881 = vadd.f32 %v846, %v878
        %882 = vst [vmem:[#allocation2] sm:$0xff] %v880
        %883 = vst [vmem:[#allocation2 + $0x8] sm:$0xff] %v881
        %p884 = scmp.eq.s32.totalorder %s31, 3
        // Predicated region
        $region73: #{tpu_custom_call.1} parent=67 // pred_check
          %p885 = pneg %p884
        $region74: #{tpu_custom_call.1} parent=67 // pred_check_branch
          %887 = sbr.rel (%p885) target = $region76
        $region75: #{tpu_custom_call.1} parent=67 // pred_region
          %v888 = vld [vmem:[#allocation2] sm:$0xff]
          %v889 = vld [vmem:[#allocation2 + $0x8] sm:$0xff]
          %v890 = vld [vmem:[%s11] sm:$0x1]
          %v892 = vperm.slane %v890, 0
          %v894 = vadd.f32 %v888, %v892
          %v895 = vadd.f32 %v889, %v892
          %896 = vst [vmem:[%s541] sm:$0xff] %v894
          %897 = vst [vmem:[%s541 + $0x8] sm:$0xff] %v895
        $region76: #{tpu_custom_call.1} parent=67 // pred_fallthru
          _
        %s898 = sand.u32 %s348, 1
        %s899 = scalar_lea.sflag [#allocation4], %s898
        %s900 = sand.u32 %s348, 1
        %s901 = smul.addr %s900, 16
        %s902 = scalar_lea.vmem [#allocation3], %s901
        // Predicated region
        $region77: #{tpu_custom_call.1} parent=67 // pred_check
          %p903 = pneg %p358
        $region78: #{tpu_custom_call.1} parent=67 // pred_check_branch
          %905 = sbr.rel (%p903) target = $region80
        $region79: #{tpu_custom_call.1} parent=67 // pred_region
          %907 = vsyncadd %s899, 0
          %s908 = smul.addr %s30, 2
          %s909 = smul.addr %s908, 8
          %s910 = scalar_lea.hbm %s12, %s909
          %s911 = sshll.u32 %s902, 4
          %s912 = int_to_ptr.vmem [resolvable:$true] %s911
          %s913 = sshll.u32 %s910, 4
          %s914 = int_to_ptr.hbm [resolvable:$true] %s913
          %919 = dma.vmem_to_hbm [thread:$0]  %s912, 256, %s914, %s899, 128, 128, 8
        $region80: #{tpu_custom_call.1} parent=67 // pred_fallthru
          _
      $region68: #{tpu_custom_call.1} parent=5 // pred_fallthru
        _
      %p920 = scmp.le.s32.totalorder 2, %s21
      // Predicated region
      $region81: #{tpu_custom_call.1} parent=5 // pred_check
        %p921 = pneg %p920
      $region82: #{tpu_custom_call.1} parent=5 // pred_check_branch
        %923 = sbr.rel (%p921) target = $region84
      $region83: #{tpu_custom_call.1} parent=5 // pred_region
        %s924 = ssub.s32 %s21, 2
        // Predicated region
        $region85: #{tpu_custom_call.1} parent=83 // pred_check
          %p925 = pneg %p364
        $region86: #{tpu_custom_call.1} parent=83 // pred_check_branch
          %927 = sbr.rel (%p925) target = $region88
        $region87: #{tpu_custom_call.1} parent=83 // pred_region
          %s928 = sand.u32 %s349, 1
          %s929 = scalar_lea.sflag [#allocation4], %s928
          %s930 = sand.u32 %s349, 1
          %s931 = smul.addr %s930, 16
          %s932 = scalar_lea.vmem [#allocation3], %s931
          %934 = dma.done %s929, 256
        $region88: #{tpu_custom_call.1} parent=83 // pred_fallthru
          _
      $region84: #{tpu_custom_call.1} parent=5 // pred_fallthru
        _
    $region6: #{tpu_custom_call.1} parent=1 // loop_footer
      %s25 = sadd.s32 1, %s21
    $region7: #{tpu_custom_call.1} parent=1 // loop_footer_branch
      %20 = sbr.rel target = $region3
    $region8: #{tpu_custom_call.1} parent=1 // loop_exit
      _
    %935 = vsyncpa [#allocation4], 1
    %s936 = scalar_lea.sflag [#allocation4], 1
    %937 = vsyncpa %s936, 1

</llo_original>
